<compile_context>
chip_gen: v5e
topology: v5e:2x2
jax: 0.10.0
libtpu: 0.0.40
codegen_flags: <defaults>
</compile_context>

<pallas_src>
import math

import numpy as np
import jax
import jax.numpy as jnp
from jax.experimental import pallas as pl


# ----------------------------- config --------------------------------------
B = 2          # batch
T = 8          # sequence length (block_size)
C = 32         # n_embd
NH = 4         # n_head
HD = C // NH   # head dim
EPS = 1e-5


def _layernorm(x, w, b):
    # PyTorch F.layer_norm: biased variance, eps inside the sqrt.
    mu = jnp.mean(x, axis=-1, keepdims=True)
    var = jnp.mean((x - mu) * (x - mu), axis=-1, keepdims=True)
    return (x - mu) * jax.lax.rsqrt(var + EPS) * w + b


def _gelu_exact(x):
    # nn.GELU() default = exact (erf-based) GELU.
    return 0.5 * x * (1.0 + jax.lax.erf(x * (1.0 / math.sqrt(2.0))))


def block_kernel(x_ref,    # (BT, C)       f32
                 p_ref,    # (8+BT, 128)   f32  params slab (see wrapper)
                 w_ref,    # (C, 12C)      bf16 [W_qkv | W_proj | W_fc | W_fc2^T]
                 o_ref):   # (BT, C)       f32
    f32, bf16 = jnp.float32, jnp.bfloat16
    x = x_ref[...]                                    # (BT, C) f32
    BT, Cdim = x.shape
    hd = Cdim // NH

    # ---- carve the f32 params slab (one DMA) ----
    ln1w  = p_ref[0:1, 0:Cdim]
    ln1b  = p_ref[1:2, 0:Cdim]
    ln2w  = p_ref[2:3, 0:Cdim]
    ln2b  = p_ref[3:4, 0:Cdim]
    bproj = p_ref[4:5, 0:Cdim]
    bfc2  = p_ref[5:6, 0:Cdim]
    bqkv  = p_ref[6:7, 0:3 * Cdim]                    # (1, 3C) q-part pre-scaled
    bfc   = p_ref[7:8, 0:4 * Cdim]                    # (1, 4C)
    mask  = p_ref[8:8 + BT, 0:BT]                     # (BT, BT) additive 0 / -1e30

    # ---- carve the bf16 weight slab (one DMA) ----
    w_qkv  = w_ref[:, 0:3 * Cdim]                     # (C, 3C) q-cols pre-scaled
    w_proj = w_ref[:, 3 * Cdim:4 * Cdim]              # (C, C)
    w_fc   = w_ref[:, 4 * Cdim:8 * Cdim]              # (C, 4C)
    w_fc2t = w_ref[:, 8 * Cdim:12 * Cdim]             # (C, 4C) = W_fc2^T

    # ---- ln_1 + causal self-attention ----
    h = _layernorm(x, ln1w, ln1b)                     # (BT, C) f32
    qkv = jnp.dot(h.astype(bf16), w_qkv,
                  preferred_element_type=f32) + bqkv  # (BT, 3C) f32, lane-dense
    qkv16 = qkv.astype(bf16)

    attn = None
    for hi in range(NH):
        q_h = qkv16[:, hi * hd:(hi + 1) * hd]                          # (BT, HD)
        k_h = qkv16[:, Cdim + hi * hd:Cdim + (hi + 1) * hd]            # (BT, HD)
        v_h = qkv16[:, 2 * Cdim + hi * hd:2 * Cdim + (hi + 1) * hd]    # (BT, HD)

        att = jnp.einsum('qd,kd->qk', q_h, k_h,
                         preferred_element_type=f32) + mask            # (BT, BT)
        att = att - jnp.max(att, axis=-1, keepdims=True)
        p = jnp.exp(att)
        p = p * pl.reciprocal(jnp.sum(p, axis=-1, keepdims=True), approx=True)
        y_h = jnp.dot(p.astype(bf16), v_h, preferred_element_type=f32)  # (BT, HD)

        # Per-head sublane slice of the dense (C, C) projection weight:
        # sum_h y_h @ Wp[h*HD:(h+1)*HD, :] == concat_h(y_h) @ Wp.
        part = jnp.dot(y_h.astype(bf16), w_proj[hi * hd:(hi + 1) * hd, :],
                       preferred_element_type=f32)                      # (BT, C)
        attn = part if attn is None else attn + part

    x1 = x + attn + bproj                             # residual 1

    # ---- ln_2 + MLP ----
    h2 = _layernorm(x1, ln2w, ln2b)
    ff = jnp.dot(h2.astype(bf16), w_fc, preferred_element_type=f32) + bfc
    ff = _gelu_exact(ff)                              # exact (erf) GELU, f32
    mlp = jnp.einsum('tf,cf->tc', ff.astype(bf16), w_fc2t,
                     preferred_element_type=f32) + bfc2

    o_ref[...] = x1 + mlp                             # residual 2
    # TODO(synk): for large C, present a lane-dense (>=128-lane) output slab to
    # avoid the masked vst on this (BT, 32) store.


def gpt_block(x, params):
    Bsz, Tlen, Cdim = x.shape
    hd = Cdim // NH
    BT = Bsz * Tlen
    f32, bf16 = jnp.float32, jnp.bfloat16
    scale = 1.0 / math.sqrt(hd)

    # ---- one-time wrapper-side packing (XLA layout plumbing) ----
    # Fold 1/sqrt(HD) into the q-columns of W_qkv / b_qkv (free).
    w_qkv = params["w_qkv"].at[:, :Cdim].multiply(scale)
    b_qkv = params["b_qkv"].at[:Cdim].multiply(scale)

    # bf16 weight slab (C, 12C): [W_qkv | W_proj | W_fc | W_fc2^T], lane-dense.
    w_slab = jnp.concatenate(
        [w_qkv, params["w_proj"], params["w_fc"], params["w_fc2"].T],
        axis=1).astype(bf16)                                           # (32, 384)

    # f32 params slab (8 + BT, 128): LN params / biases / additive mask rows.
    def _row(v):
        v = v.reshape(-1).astype(f32)
        return jnp.pad(v, (0, 128 - v.shape[0]))

    rows = jnp.stack([_row(params["ln1_w"]), _row(params["ln1_b"]),
                      _row(params["ln2_w"]), _row(params["ln2_b"]),
                      _row(params["b_proj"]), _row(params["b_fc2"]),
                      _row(b_qkv), _row(params["b_fc"])], axis=0)      # (8, 128)

    # Trace-time (same-batch & causal) additive mask over the flattened B*T axis.
    idx = np.arange(BT)
    allowed = ((idx[:, None] // Tlen) == (idx[None, :] // Tlen)) & \
              (idx[:, None] >= idx[None, :])
    mask_bias = np.where(allowed, 0.0, -1e30).astype(np.float32)       # (BT, BT)
    mask_rows = jnp.pad(jnp.asarray(mask_bias), ((0, 0), (0, 128 - BT)))

    p_slab = jnp.concatenate([rows, mask_rows], axis=0)                # (8+BT, 128)

    x2 = x.reshape(BT, Cdim).astype(f32)

    # Single fused step: no grid -> whole arrays resident in VMEM, no pipeline
    # prologue/epilogue.  (On v7x, grid=(B,) with "parallel" semantics could
    # engage the second TensorCore; at these sizes fixed costs dominate.)
    out2 = pl.pallas_call(
        block_kernel,
        out_shape=jax.ShapeDtypeStruct((BT, Cdim), jnp.float32),
    )(x2, p_slab, w_slab)
    return out2.reshape(Bsz, Tlen, Cdim)


gpt_block = jax.jit(gpt_block)


# --------------------------- reference (pure JAX) ---------------------------
def gpt_block_ref(x, p):
    def ln(v, w, b):
        mu = v.mean(-1, keepdims=True)
        var = ((v - mu) ** 2).mean(-1, keepdims=True)
        return (v - mu) / jnp.sqrt(var + EPS) * w + b

    h = ln(x, p["ln1_w"], p["ln1_b"])
    qkv = h @ p["w_qkv"] + p["b_qkv"]
    q, k, v = jnp.split(qkv, 3, axis=-1)
    q = q.reshape(B, T, NH, HD).transpose(0, 2, 1, 3)
    k = k.reshape(B, T, NH, HD).transpose(0, 2, 1, 3)
    v = v.reshape(B, T, NH, HD).transpose(0, 2, 1, 3)
    att = jnp.einsum("bhtd,bhsd->bhts", q, k) / math.sqrt(HD)
    mask = jnp.tril(jnp.ones((T, T), bool))
    att = jnp.where(mask, att, -jnp.inf)
    att = jax.nn.softmax(att, axis=-1)
    y = jnp.einsum("bhts,bhsd->bhtd", att, v)
    y = y.transpose(0, 2, 1, 3).reshape(B, T, C)
    x1 = x + (y @ p["w_proj"] + p["b_proj"])
    h2 = ln(x1, p["ln2_w"], p["ln2_b"])
    ff = jax.nn.gelu(h2 @ p["w_fc"] + p["b_fc"], approximate=False)
    return x1 + (ff @ p["w_fc2"] + p["b_fc2"])


# ------------------------------- main ---------------------------------------
if __name__ == "__main__":
    key = jax.random.PRNGKey(0)
    ks = jax.random.split(key, 8)

    params = {
        "ln1_w": jnp.ones((C,), jnp.float32),
        "ln1_b": jnp.zeros((C,), jnp.float32),
        "w_qkv": 0.02 * jax.random.normal(ks[0], (C, 3 * C), jnp.float32),
        "b_qkv": 0.01 * jax.random.normal(ks[1], (3 * C,), jnp.float32),
        "w_proj": 0.02 * jax.random.normal(ks[2], (C, C), jnp.float32),
        "b_proj": 0.01 * jax.random.normal(ks[3], (C,), jnp.float32),
        "ln2_w": jnp.ones((C,), jnp.float32),
        "ln2_b": jnp.zeros((C,), jnp.float32),
        "w_fc": 0.02 * jax.random.normal(ks[4], (C, 4 * C), jnp.float32),
        "b_fc": 0.01 * jax.random.normal(ks[5], (4 * C,), jnp.float32),
        "w_fc2": 0.02 * jax.random.normal(ks[6], (4 * C, C), jnp.float32),
        "b_fc2": 0.01 * jax.random.normal(ks[7], (C,), jnp.float32),
    }

    x = jax.random.normal(jax.random.PRNGKey(42), (B, T, C), jnp.float32)

    out = jax.block_until_ready(gpt_block(x, params))
    ref = jax.block_until_ready(gpt_block_ref(x, params))

    assert out.shape == (B, T, C)
    max_err = float(jnp.max(jnp.abs(out - ref)))
    # bf16 MXU inputs with f32 accumulation + approx reciprocal: few 1e-4 err.
    assert jnp.allclose(out, ref, atol=2e-3, rtol=2e-3), f"max abs err {max_err}"
    print("KERNEL_OK")
</pallas_src>

<mosaic_0001>
module attributes {stable_mosaic.version = 11 : i64} {
  func.func @block_kernel(%arg0: memref<16x32xf32, #tpu.memory_space<vmem>>, %arg1: memref<24x128xf32, #tpu.memory_space<vmem>>, %arg2: memref<32x384xbf16, #tpu.memory_space<vmem>>, %arg3: memref<16x32xf32, #tpu.memory_space<vmem>>) attributes {dimension_semantics = [], scalar_prefetch = 0 : i64, scratch_operands = 0 : i64, tpu.core_type = #tpu.core_type<tc>} {
    %c0 = arith.constant 0 : index
    %c0_0 = arith.constant 0 : index
    %0 = vector.load %arg0[%c0, %c0_0] : memref<16x32xf32, #tpu.memory_space<vmem>>, vector<16x32xf32>
    %c0_1 = arith.constant 0 : index
    %c0_2 = arith.constant 0 : index
    %1 = vector.load %arg1[%c0_1, %c0_2] : memref<24x128xf32, #tpu.memory_space<vmem>>, vector<1x32xf32>
    %c1 = arith.constant 1 : index
    %c0_3 = arith.constant 0 : index
    %2 = vector.load %arg1[%c1, %c0_3] : memref<24x128xf32, #tpu.memory_space<vmem>>, vector<1x32xf32>
    %c2 = arith.constant 2 : index
    %c0_4 = arith.constant 0 : index
    %3 = vector.load %arg1[%c2, %c0_4] : memref<24x128xf32, #tpu.memory_space<vmem>>, vector<1x32xf32>
    %c3 = arith.constant 3 : index
    %c0_5 = arith.constant 0 : index
    %4 = vector.load %arg1[%c3, %c0_5] : memref<24x128xf32, #tpu.memory_space<vmem>>, vector<1x32xf32>
    %c4 = arith.constant 4 : index
    %c0_6 = arith.constant 0 : index
    %5 = vector.load %arg1[%c4, %c0_6] : memref<24x128xf32, #tpu.memory_space<vmem>>, vector<1x32xf32>
    %c5 = arith.constant 5 : index
    %c0_7 = arith.constant 0 : index
    %6 = vector.load %arg1[%c5, %c0_7] : memref<24x128xf32, #tpu.memory_space<vmem>>, vector<1x32xf32>
    %c6 = arith.constant 6 : index
    %c0_8 = arith.constant 0 : index
    %7 = vector.load %arg1[%c6, %c0_8] : memref<24x128xf32, #tpu.memory_space<vmem>>, vector<1x96xf32>
    %c7 = arith.constant 7 : index
    %c0_9 = arith.constant 0 : index
    %8 = vector.load %arg1[%c7, %c0_9] : memref<24x128xf32, #tpu.memory_space<vmem>>, vector<1x128xf32>
    %c8 = arith.constant 8 : index
    %c0_10 = arith.constant 0 : index
    %9 = vector.load %arg1[%c8, %c0_10] : memref<24x128xf32, #tpu.memory_space<vmem>>, vector<16x16xf32>
    %c0_11 = arith.constant 0 : index
    %c0_12 = arith.constant 0 : index
    %10 = vector.load %arg2[%c0_11, %c0_12] : memref<32x384xbf16, #tpu.memory_space<vmem>>, vector<32x96xbf16>
    %c0_13 = arith.constant 0 : index
    %c96 = arith.constant 96 : index
    %11 = vector.load %arg2[%c0_13, %c96] : memref<32x384xbf16, #tpu.memory_space<vmem>>, vector<32x32xbf16>
    %c0_14 = arith.constant 0 : index
    %c128 = arith.constant 128 : index
    %12 = vector.load %arg2[%c0_14, %c128] : memref<32x384xbf16, #tpu.memory_space<vmem>>, vector<32x128xbf16>
    %c0_15 = arith.constant 0 : index
    %c256 = arith.constant 256 : index
    %13 = vector.load %arg2[%c0_15, %c256] : memref<32x384xbf16, #tpu.memory_space<vmem>>, vector<32x128xbf16>
    %cst = arith.constant dense<0.000000e+00> : vector<16xf32>
    %14 = vector.multi_reduction <add>, %0, %cst [1] : vector<16x32xf32> to vector<16xf32>
    %15 = vector.shape_cast %14 : vector<16xf32> to vector<16x1xf32>
    %cst_16 = arith.constant 3.200000e+01 : f32
    %16 = vector.broadcast %cst_16 : f32 to vector<16x1xf32>
    %17 = arith.divf %15, %16 : vector<16x1xf32>
    %18 = vector.broadcast %17 : vector<16x1xf32> to vector<16x32xf32>
    %19 = arith.subf %0, %18 : vector<16x32xf32>
    %20 = vector.broadcast %17 : vector<16x1xf32> to vector<16x32xf32>
    %21 = arith.subf %0, %20 : vector<16x32xf32>
    %22 = arith.mulf %19, %21 : vector<16x32xf32>
    %cst_17 = arith.constant dense<0.000000e+00> : vector<16xf32>
    %23 = vector.multi_reduction <add>, %22, %cst_17 [1] : vector<16x32xf32> to vector<16xf32>
    %24 = vector.shape_cast %23 : vector<16xf32> to vector<16x1xf32>
    %cst_18 = arith.constant 3.200000e+01 : f32
    %25 = vector.broadcast %cst_18 : f32 to vector<16x1xf32>
    %26 = arith.divf %24, %25 : vector<16x1xf32>
    %27 = vector.broadcast %17 : vector<16x1xf32> to vector<16x32xf32>
    %28 = arith.subf %0, %27 : vector<16x32xf32>
    %cst_19 = arith.constant 9.99999974E-6 : f32
    %29 = vector.broadcast %cst_19 : f32 to vector<16x1xf32>
    %30 = arith.addf %26, %29 : vector<16x1xf32>
    %31 = math.rsqrt %30 : vector<16x1xf32>
    %32 = vector.broadcast %31 : vector<16x1xf32> to vector<16x32xf32>
    %33 = arith.mulf %28, %32 : vector<16x32xf32>
    %34 = vector.broadcast %1 : vector<1x32xf32> to vector<16x32xf32>
    %35 = arith.mulf %33, %34 : vector<16x32xf32>
    %36 = vector.broadcast %2 : vector<1x32xf32> to vector<16x32xf32>
    %37 = arith.addf %35, %36 : vector<16x32xf32>
    %38 = arith.truncf %37 : vector<16x32xf32> to vector<16x32xbf16>
    %cst_20 = arith.constant dense<0.000000e+00> : vector<16x96xf32>
    %39 = tpu.matmul %38, %10, %cst_20 {dimension_numbers = #tpu.dot_dimension_numbers<[1], [0], [0], [1], [0, 0, 1, 1], [], []>} : vector<16x32xbf16>, vector<32x96xbf16>, vector<16x96xf32> -> vector<16x96xf32>
    %40 = vector.broadcast %7 : vector<1x96xf32> to vector<16x96xf32>
    %41 = arith.addf %39, %40 : vector<16x96xf32>
    %42 = arith.truncf %41 : vector<16x96xf32> to vector<16x96xbf16>
    %43 = vector.extract_strided_slice %42 {offsets = [0, 0], sizes = [16, 8], strides = [1, 1]} : vector<16x96xbf16> to vector<16x8xbf16>
    %44 = vector.extract_strided_slice %42 {offsets = [0, 32], sizes = [16, 8], strides = [1, 1]} : vector<16x96xbf16> to vector<16x8xbf16>
    %45 = vector.extract_strided_slice %42 {offsets = [0, 64], sizes = [16, 8], strides = [1, 1]} : vector<16x96xbf16> to vector<16x8xbf16>
    "tpu.trace_start"() <{level = 10 : i32, message = "qd,kd->qk"}> : () -> ()
    %cst_21 = arith.constant dense<0.000000e+00> : vector<16x16xf32>
    %46 = tpu.matmul %43, %44, %cst_21 {dimension_numbers = #tpu.dot_dimension_numbers<[1], [1], [0], [0], [0, 0, 1, 0], [], []>} : vector<16x8xbf16>, vector<16x8xbf16>, vector<16x16xf32> -> vector<16x16xf32>
    "tpu.trace_stop"() : () -> ()
    %47 = arith.addf %46, %9 : vector<16x16xf32>
    %cst_22 = arith.constant dense<0xFF800000> : vector<16xf32>
    %48 = vector.multi_reduction <maximumf>, %47, %cst_22 [1] : vector<16x16xf32> to vector<16xf32>
    %49 = vector.shape_cast %48 : vector<16xf32> to vector<16x1xf32>
    %50 = vector.broadcast %49 : vector<16x1xf32> to vector<16x16xf32>
    %51 = arith.subf %47, %50 : vector<16x16xf32>
    %52 = math.exp %51 : vector<16x16xf32>
    %cst_23 = arith.constant dense<0.000000e+00> : vector<16xf32>
    %53 = vector.multi_reduction <add>, %52, %cst_23 [1] : vector<16x16xf32> to vector<16xf32>
    %54 = vector.shape_cast %53 : vector<16xf32> to vector<16x1xf32>
    %55 = tpu.reciprocal %54 {approx = true} : vector<16x1xf32> -> vector<16x1xf32>
    %56 = vector.broadcast %55 : vector<16x1xf32> to vector<16x16xf32>
    %57 = arith.mulf %52, %56 : vector<16x16xf32>
    %58 = arith.truncf %57 : vector<16x16xf32> to vector<16x16xbf16>
    %cst_24 = arith.constant dense<0.000000e+00> : vector<16x8xf32>
    %59 = tpu.matmul %58, %45, %cst_24 {dimension_numbers = #tpu.dot_dimension_numbers<[1], [0], [0], [1], [0, 0, 1, 1], [], []>} : vector<16x16xbf16>, vector<16x8xbf16>, vector<16x8xf32> -> vector<16x8xf32>
    %60 = arith.truncf %59 : vector<16x8xf32> to vector<16x8xbf16>
    %61 = vector.extract_strided_slice %11 {offsets = [0, 0], sizes = [8, 32], strides = [1, 1]} : vector<32x32xbf16> to vector<8x32xbf16>
    %cst_25 = arith.constant dense<0.000000e+00> : vector<16x32xf32>
    %62 = tpu.matmul %60, %61, %cst_25 {dimension_numbers = #tpu.dot_dimension_numbers<[1], [0], [0], [1], [0, 0, 1, 1], [], []>} : vector<16x8xbf16>, vector<8x32xbf16>, vector<16x32xf32> -> vector<16x32xf32>
    %63 = vector.extract_strided_slice %42 {offsets = [0, 8], sizes = [16, 8], strides = [1, 1]} : vector<16x96xbf16> to vector<16x8xbf16>
    %64 = vector.extract_strided_slice %42 {offsets = [0, 40], sizes = [16, 8], strides = [1, 1]} : vector<16x96xbf16> to vector<16x8xbf16>
    %65 = vector.extract_strided_slice %42 {offsets = [0, 72], sizes = [16, 8], strides = [1, 1]} : vector<16x96xbf16> to vector<16x8xbf16>
    "tpu.trace_start"() <{level = 10 : i32, message = "qd,kd->qk"}> : () -> ()
    %cst_26 = arith.constant dense<0.000000e+00> : vector<16x16xf32>
    %66 = tpu.matmul %63, %64, %cst_26 {dimension_numbers = #tpu.dot_dimension_numbers<[1], [1], [0], [0], [0, 0, 1, 0], [], []>} : vector<16x8xbf16>, vector<16x8xbf16>, vector<16x16xf32> -> vector<16x16xf32>
    "tpu.trace_stop"() : () -> ()
    %67 = arith.addf %66, %9 : vector<16x16xf32>
    %cst_27 = arith.constant dense<0xFF800000> : vector<16xf32>
    %68 = vector.multi_reduction <maximumf>, %67, %cst_27 [1] : vector<16x16xf32> to vector<16xf32>
    %69 = vector.shape_cast %68 : vector<16xf32> to vector<16x1xf32>
    %70 = vector.broadcast %69 : vector<16x1xf32> to vector<16x16xf32>
    %71 = arith.subf %67, %70 : vector<16x16xf32>
    %72 = math.exp %71 : vector<16x16xf32>
    %cst_28 = arith.constant dense<0.000000e+00> : vector<16xf32>
    %73 = vector.multi_reduction <add>, %72, %cst_28 [1] : vector<16x16xf32> to vector<16xf32>
    %74 = vector.shape_cast %73 : vector<16xf32> to vector<16x1xf32>
    %75 = tpu.reciprocal %74 {approx = true} : vector<16x1xf32> -> vector<16x1xf32>
    %76 = vector.broadcast %75 : vector<16x1xf32> to vector<16x16xf32>
    %77 = arith.mulf %72, %76 : vector<16x16xf32>
    %78 = arith.truncf %77 : vector<16x16xf32> to vector<16x16xbf16>
    %cst_29 = arith.constant dense<0.000000e+00> : vector<16x8xf32>
    %79 = tpu.matmul %78, %65, %cst_29 {dimension_numbers = #tpu.dot_dimension_numbers<[1], [0], [0], [1], [0, 0, 1, 1], [], []>} : vector<16x16xbf16>, vector<16x8xbf16>, vector<16x8xf32> -> vector<16x8xf32>
    %80 = arith.truncf %79 : vector<16x8xf32> to vector<16x8xbf16>
    %81 = vector.extract_strided_slice %11 {offsets = [8, 0], sizes = [8, 32], strides = [1, 1]} : vector<32x32xbf16> to vector<8x32xbf16>
    %cst_30 = arith.constant dense<0.000000e+00> : vector<16x32xf32>
    %82 = tpu.matmul %80, %81, %cst_30 {dimension_numbers = #tpu.dot_dimension_numbers<[1], [0], [0], [1], [0, 0, 1, 1], [], []>} : vector<16x8xbf16>, vector<8x32xbf16>, vector<16x32xf32> -> vector<16x32xf32>
    %83 = arith.addf %62, %82 : vector<16x32xf32>
    %84 = vector.extract_strided_slice %42 {offsets = [0, 16], sizes = [16, 8], strides = [1, 1]} : vector<16x96xbf16> to vector<16x8xbf16>
    %85 = vector.extract_strided_slice %42 {offsets = [0, 48], sizes = [16, 8], strides = [1, 1]} : vector<16x96xbf16> to vector<16x8xbf16>
    %86 = vector.extract_strided_slice %42 {offsets = [0, 80], sizes = [16, 8], strides = [1, 1]} : vector<16x96xbf16> to vector<16x8xbf16>
    "tpu.trace_start"() <{level = 10 : i32, message = "qd,kd->qk"}> : () -> ()
    %cst_31 = arith.constant dense<0.000000e+00> : vector<16x16xf32>
    %87 = tpu.matmul %84, %85, %cst_31 {dimension_numbers = #tpu.dot_dimension_numbers<[1], [1], [0], [0], [0, 0, 1, 0], [], []>} : vector<16x8xbf16>, vector<16x8xbf16>, vector<16x16xf32> -> vector<16x16xf32>
    "tpu.trace_stop"() : () -> ()
    %88 = arith.addf %87, %9 : vector<16x16xf32>
    %cst_32 = arith.constant dense<0xFF800000> : vector<16xf32>
    %89 = vector.multi_reduction <maximumf>, %88, %cst_32 [1] : vector<16x16xf32> to vector<16xf32>
    %90 = vector.shape_cast %89 : vector<16xf32> to vector<16x1xf32>
    %91 = vector.broadcast %90 : vector<16x1xf32> to vector<16x16xf32>
    %92 = arith.subf %88, %91 : vector<16x16xf32>
    %93 = math.exp %92 : vector<16x16xf32>
    %cst_33 = arith.constant dense<0.000000e+00> : vector<16xf32>
    %94 = vector.multi_reduction <add>, %93, %cst_33 [1] : vector<16x16xf32> to vector<16xf32>
    %95 = vector.shape_cast %94 : vector<16xf32> to vector<16x1xf32>
    %96 = tpu.reciprocal %95 {approx = true} : vector<16x1xf32> -> vector<16x1xf32>
    %97 = vector.broadcast %96 : vector<16x1xf32> to vector<16x16xf32>
    %98 = arith.mulf %93, %97 : vector<16x16xf32>
    %99 = arith.truncf %98 : vector<16x16xf32> to vector<16x16xbf16>
    %cst_34 = arith.constant dense<0.000000e+00> : vector<16x8xf32>
    %100 = tpu.matmul %99, %86, %cst_34 {dimension_numbers = #tpu.dot_dimension_numbers<[1], [0], [0], [1], [0, 0, 1, 1], [], []>} : vector<16x16xbf16>, vector<16x8xbf16>, vector<16x8xf32> -> vector<16x8xf32>
    %101 = arith.truncf %100 : vector<16x8xf32> to vector<16x8xbf16>
    %102 = vector.extract_strided_slice %11 {offsets = [16, 0], sizes = [8, 32], strides = [1, 1]} : vector<32x32xbf16> to vector<8x32xbf16>
    %cst_35 = arith.constant dense<0.000000e+00> : vector<16x32xf32>
    %103 = tpu.matmul %101, %102, %cst_35 {dimension_numbers = #tpu.dot_dimension_numbers<[1], [0], [0], [1], [0, 0, 1, 1], [], []>} : vector<16x8xbf16>, vector<8x32xbf16>, vector<16x32xf32> -> vector<16x32xf32>
    %104 = arith.addf %83, %103 : vector<16x32xf32>
    %105 = vector.extract_strided_slice %42 {offsets = [0, 24], sizes = [16, 8], strides = [1, 1]} : vector<16x96xbf16> to vector<16x8xbf16>
    %106 = vector.extract_strided_slice %42 {offsets = [0, 56], sizes = [16, 8], strides = [1, 1]} : vector<16x96xbf16> to vector<16x8xbf16>
    %107 = vector.extract_strided_slice %42 {offsets = [0, 88], sizes = [16, 8], strides = [1, 1]} : vector<16x96xbf16> to vector<16x8xbf16>
    "tpu.trace_start"() <{level = 10 : i32, message = "qd,kd->qk"}> : () -> ()
    %cst_36 = arith.constant dense<0.000000e+00> : vector<16x16xf32>
    %108 = tpu.matmul %105, %106, %cst_36 {dimension_numbers = #tpu.dot_dimension_numbers<[1], [1], [0], [0], [0, 0, 1, 0], [], []>} : vector<16x8xbf16>, vector<16x8xbf16>, vector<16x16xf32> -> vector<16x16xf32>
    "tpu.trace_stop"() : () -> ()
    %109 = arith.addf %108, %9 : vector<16x16xf32>
    %cst_37 = arith.constant dense<0xFF800000> : vector<16xf32>
    %110 = vector.multi_reduction <maximumf>, %109, %cst_37 [1] : vector<16x16xf32> to vector<16xf32>
    %111 = vector.shape_cast %110 : vector<16xf32> to vector<16x1xf32>
    %112 = vector.broadcast %111 : vector<16x1xf32> to vector<16x16xf32>
    %113 = arith.subf %109, %112 : vector<16x16xf32>
    %114 = math.exp %113 : vector<16x16xf32>
    %cst_38 = arith.constant dense<0.000000e+00> : vector<16xf32>
    %115 = vector.multi_reduction <add>, %114, %cst_38 [1] : vector<16x16xf32> to vector<16xf32>
    %116 = vector.shape_cast %115 : vector<16xf32> to vector<16x1xf32>
    %117 = tpu.reciprocal %116 {approx = true} : vector<16x1xf32> -> vector<16x1xf32>
    %118 = vector.broadcast %117 : vector<16x1xf32> to vector<16x16xf32>
    %119 = arith.mulf %114, %118 : vector<16x16xf32>
    %120 = arith.truncf %119 : vector<16x16xf32> to vector<16x16xbf16>
    %cst_39 = arith.constant dense<0.000000e+00> : vector<16x8xf32>
    %121 = tpu.matmul %120, %107, %cst_39 {dimension_numbers = #tpu.dot_dimension_numbers<[1], [0], [0], [1], [0, 0, 1, 1], [], []>} : vector<16x16xbf16>, vector<16x8xbf16>, vector<16x8xf32> -> vector<16x8xf32>
    %122 = arith.truncf %121 : vector<16x8xf32> to vector<16x8xbf16>
    %123 = vector.extract_strided_slice %11 {offsets = [24, 0], sizes = [8, 32], strides = [1, 1]} : vector<32x32xbf16> to vector<8x32xbf16>
    %cst_40 = arith.constant dense<0.000000e+00> : vector<16x32xf32>
    %124 = tpu.matmul %122, %123, %cst_40 {dimension_numbers = #tpu.dot_dimension_numbers<[1], [0], [0], [1], [0, 0, 1, 1], [], []>} : vector<16x8xbf16>, vector<8x32xbf16>, vector<16x32xf32> -> vector<16x32xf32>
    %125 = arith.addf %104, %124 : vector<16x32xf32>
    %126 = arith.addf %0, %125 : vector<16x32xf32>
    %127 = vector.broadcast %5 : vector<1x32xf32> to vector<16x32xf32>
    %128 = arith.addf %126, %127 : vector<16x32xf32>
    %cst_41 = arith.constant dense<0.000000e+00> : vector<16xf32>
    %129 = vector.multi_reduction <add>, %128, %cst_41 [1] : vector<16x32xf32> to vector<16xf32>
    %130 = vector.shape_cast %129 : vector<16xf32> to vector<16x1xf32>
    %cst_42 = arith.constant 3.200000e+01 : f32
    %131 = vector.broadcast %cst_42 : f32 to vector<16x1xf32>
    %132 = arith.divf %130, %131 : vector<16x1xf32>
    %133 = vector.broadcast %132 : vector<16x1xf32> to vector<16x32xf32>
    %134 = arith.subf %128, %133 : vector<16x32xf32>
    %135 = vector.broadcast %132 : vector<16x1xf32> to vector<16x32xf32>
    %136 = arith.subf %128, %135 : vector<16x32xf32>
    %137 = arith.mulf %134, %136 : vector<16x32xf32>
    %cst_43 = arith.constant dense<0.000000e+00> : vector<16xf32>
    %138 = vector.multi_reduction <add>, %137, %cst_43 [1] : vector<16x32xf32> to vector<16xf32>
    %139 = vector.shape_cast %138 : vector<16xf32> to vector<16x1xf32>
    %cst_44 = arith.constant 3.200000e+01 : f32
    %140 = vector.broadcast %cst_44 : f32 to vector<16x1xf32>
    %141 = arith.divf %139, %140 : vector<16x1xf32>
    %142 = vector.broadcast %132 : vector<16x1xf32> to vector<16x32xf32>
    %143 = arith.subf %128, %142 : vector<16x32xf32>
    %cst_45 = arith.constant 9.99999974E-6 : f32
    %144 = vector.broadcast %cst_45 : f32 to vector<16x1xf32>
    %145 = arith.addf %141, %144 : vector<16x1xf32>
    %146 = math.rsqrt %145 : vector<16x1xf32>
    %147 = vector.broadcast %146 : vector<16x1xf32> to vector<16x32xf32>
    %148 = arith.mulf %143, %147 : vector<16x32xf32>
    %149 = vector.broadcast %3 : vector<1x32xf32> to vector<16x32xf32>
    %150 = arith.mulf %148, %149 : vector<16x32xf32>
    %151 = vector.broadcast %4 : vector<1x32xf32> to vector<16x32xf32>
    %152 = arith.addf %150, %151 : vector<16x32xf32>
    %153 = arith.truncf %152 : vector<16x32xf32> to vector<16x32xbf16>
    %cst_46 = arith.constant dense<0.000000e+00> : vector<16x128xf32>
    %154 = tpu.matmul %153, %12, %cst_46 {dimension_numbers = #tpu.dot_dimension_numbers<[1], [0], [0], [1], [0, 0, 1, 1], [], []>} : vector<16x32xbf16>, vector<32x128xbf16>, vector<16x128xf32> -> vector<16x128xf32>
    %155 = vector.broadcast %8 : vector<1x128xf32> to vector<16x128xf32>
    %156 = arith.addf %154, %155 : vector<16x128xf32>
    %cst_47 = arith.constant 5.000000e-01 : f32
    %157 = vector.broadcast %cst_47 : f32 to vector<16x128xf32>
    %158 = arith.mulf %157, %156 : vector<16x128xf32>
    %cst_48 = arith.constant 0.707106769 : f32
    %159 = vector.broadcast %cst_48 : f32 to vector<16x128xf32>
    %160 = arith.mulf %156, %159 : vector<16x128xf32>
    %161 = math.erf %160 : vector<16x128xf32>
    %cst_49 = arith.constant 1.000000e+00 : f32
    %162 = vector.broadcast %cst_49 : f32 to vector<16x128xf32>
    %163 = arith.addf %162, %161 : vector<16x128xf32>
    %164 = arith.mulf %158, %163 : vector<16x128xf32>
    %165 = arith.truncf %164 : vector<16x128xf32> to vector<16x128xbf16>
    "tpu.trace_start"() <{level = 10 : i32, message = "tf,cf->tc"}> : () -> ()
    %cst_50 = arith.constant dense<0.000000e+00> : vector<16x32xf32>
    %166 = tpu.matmul %165, %13, %cst_50 {dimension_numbers = #tpu.dot_dimension_numbers<[1], [1], [0], [0], [0, 0, 1, 0], [], []>} : vector<16x128xbf16>, vector<32x128xbf16>, vector<16x32xf32> -> vector<16x32xf32>
    "tpu.trace_stop"() : () -> ()
    %167 = vector.broadcast %6 : vector<1x32xf32> to vector<16x32xf32>
    %168 = arith.addf %166, %167 : vector<16x32xf32>
    %169 = arith.addf %128, %168 : vector<16x32xf32>
    %c0_51 = arith.constant 0 : index
    %c0_52 = arith.constant 0 : index
    %170 = vector.load %arg3[%c0_51, %c0_52] : memref<16x32xf32, #tpu.memory_space<vmem>>, vector<16x32xf32>
    tpu.vector_store %arg3[%c0_51, %c0_52], %169 {strides = array<i32>} : memref<16x32xf32, #tpu.memory_space<vmem>>, vector<16x32xf32>,
    return
  }
}

</mosaic_0001>

<llo_original>
// kernel: gpt_block.1
$region0: #{gpt_block.1}
  #allocation0 [shape = 'u32[]', space=smem, size = 0x4, offset = 0x4, fixed_abs, tag = 'smem constant byte address 0x4 - core index']
  #allocation1 [shape = 'u32[72,128]{1,0:T(1,128)}', space=vmem, size = 0x9000, scoped, tag = 'internal scratch']
  %s0 = inlined_call_operand.vmem [shape: f32[16,32], index: 0, kind: input, shape index: {}]
  %s1 = inlined_call_operand.vmem [shape: f32[24,128], index: 1, kind: input, shape index: {}]
  %s2 = inlined_call_operand.vmem [shape: bf16[32,384], index: 2, kind: input, shape index: {}]
  %s3 = inlined_call_operand.hbm [shape: f32[16,32], index: 3, kind: output, shape index: {}]
  %s4 = sld [smem:[#allocation0]]
  $region22: #{gpt_block.1} parent=0
    _
  %s6 = ssub.s32 1, %s4
  %s7 = scalar_select 0, %s6, %s4
  $region1: #{gpt_block.1} parent=0
    #allocation2 [shape = 'u8[8192]{0}', space=vmem, size = 0x2000, scoped, tag = 'output window, operand 0, single buffered']
    #allocation3 [shape = 's32[1]{0}', space=sflag, size = 0x4, scoped, tag = 'scoped memory for gpt_block.1']
    %8 = vsyncpa [#allocation3], 0
    // Predicated region
    $region2: #{gpt_block.1} parent=1 // pred_check
      _
    $region3: #{gpt_block.1} parent=1 // pred_check_branch
      %10 = sbr.rel (0) target = $region5
    $region4: #{gpt_block.1} parent=1 // pred_region
      _
    $region5: #{gpt_block.1} parent=1 // pred_fallthru
      _
    // Predicated region
    $region6: #{gpt_block.1} parent=1 // pred_check
      _
    $region7: #{gpt_block.1} parent=1 // pred_check_branch
      %12 = sbr.rel (0) target = $region9
    $region8: #{gpt_block.1} parent=1 // pred_region
      _
    $region9: #{gpt_block.1} parent=1 // pred_fallthru
      _
    // Predicated region
    $region10: #{gpt_block.1} parent=1 // pred_check
      _
    $region11: #{gpt_block.1} parent=1 // pred_check_branch
      %14 = sbr.rel (0) target = $region13
    $region12: #{gpt_block.1} parent=1 // pred_region
      _
    $region13: #{gpt_block.1} parent=1 // pred_fallthru
      _
    %v16 = vld [vmem:[%s0] sm:$0xff]
    %v17 = vld [vmem:[%s0 + $0x8] sm:$0xff]
    %v18 = vld [vmem:[%s1] sm:$0x1]
    %v19 = vld [vmem:[%s1 + $0x1] sm:$0x1]
    %v20 = vld [vmem:[%s1 + $0x2] sm:$0x1]
    %v21 = vld [vmem:[%s1 + $0x3] sm:$0x1]
    %v22 = vld [vmem:[%s1 + $0x4] sm:$0x1]
    %v23 = vld [vmem:[%s1 + $0x5] sm:$0x1]
    %v24 = vld [vmem:[%s1 + $0x6] sm:$0x1]
    %v25 = vld [vmem:[%s1 + $0x7] sm:$0x1]
    %v26 = vld [vmem:[%s1 + $0x8] sm:$0xff]
    %v27 = vld [vmem:[%s1 + $0x10] sm:$0xff]
    %v28 = vld [vmem:[%s2] sm:$0xf]
    %v29 = vld [vmem:[%s2 + $0xc] sm:$0xf]
    %v30 = vld [vmem:[%s2 + $0x18] sm:$0xf]
    %v31 = vld [vmem:[%s2 + $0x24] sm:$0xf]
    %v32 = vld [vmem:[%s2 + $0x4] sm:$0xf]
    %v33 = vld [vmem:[%s2 + $0x10] sm:$0xf]
    %v34 = vld [vmem:[%s2 + $0x1c] sm:$0xf]
    %v35 = vld [vmem:[%s2 + $0x28] sm:$0xf]
    %v36 = vld [vmem:[%s2 + $0x8] sm:$0xf]
    %v37 = vld [vmem:[%s2 + $0x14] sm:$0xf]
    %v38 = vld [vmem:[%s2 + $0x20] sm:$0xf]
    %v39 = vld [vmem:[%s2 + $0x2c] sm:$0xf]
    %vm40 = vcmask 261120
    %v41 = vsel %vm40, %v16, 0.0
    %42 = vadd.xlane.f32.xlu0 %v41
    %v43 = vpop.xlane.xlu0 %42
    %v44 = vsel %vm40, %v17, 0.0
    %45 = vadd.xlane.f32.xlu0 %v44
    %v46 = vpop.xlane.xlu0 %45
    %v47 = vrcp.pop 32.0
    %v48 = vmul.f32 32.0, %v47
    %v49 = vsub.f32 1.0, %v48
    %v50 = vmul.f32 %v47, %v49
    %v51 = vadd.f32 %v47, %v50
    %vm52 = vweird.f32 %v47
    %v53 = vsel %vm52, %v47, %v51
    %v54 = vmul.f32 %v43, %v53
    %v55 = vmul.f32 %v46, %v53
    %v56 = vsub.f32 %v16, %v54
    %v57 = vsub.f32 %v17, %v55
    %v58 = vmul.f32 %v56, %v56
    %v59 = vmul.f32 %v57, %v57
    %v60 = vsel %vm40, %v58, 0.0
    %61 = vadd.xlane.f32.xlu0 %v60
    %v62 = vpop.xlane.xlu0 %61
    %v63 = vsel %vm40, %v59, 0.0
    %64 = vadd.xlane.f32.xlu0 %v63
    %v65 = vpop.xlane.xlu0 %64
    %v66 = vmul.f32 %v62, %v53
    %v67 = vmul.f32 %v65, %v53
    %v68 = vadd.f32 %v66, 1e-05
    %v69 = vadd.f32 %v67, 1e-05
    %v70 = vrsqrt.pop %v68
    %v71 = vmul.f32 %v70, %v68
    %v72 = vmul.f32 %v71, %v70
    %v73 = vmul.f32 0.5, %v72
    %v74 = vsub.f32 1.5, %v73
    %v75 = vmul.f32 %v70, %v74
    %vm76 = vweird.f32 %v68
    %vm77 = vweird.f32 %v70
    %vm78 = vmor %vm76, %vm77
    %v79 = vsel %vm78, %v70, %v75
    %v80 = vrsqrt.pop %v69
    %v81 = vmul.f32 %v80, %v69
    %v82 = vmul.f32 %v81, %v80
    %v83 = vmul.f32 0.5, %v82
    %v84 = vsub.f32 1.5, %v83
    %v85 = vmul.f32 %v80, %v84
    %vm86 = vweird.f32 %v69
    %vm87 = vweird.f32 %v80
    %vm88 = vmor %vm86, %vm87
    %v89 = vsel %vm88, %v80, %v85
    %v90 = vmul.f32 %v56, %v79
    %v91 = vmul.f32 %v57, %v89
    %v92 = vperm.slane %v18, 0
    %v93 = vmul.f32 %v90, %v92
    %v94 = vmul.f32 %v91, %v92
    %v95 = vperm.slane %v19, 0
    %v96 = vadd.f32 %v93, %v95
    %v97 = vadd.f32 %v94, %v95
    %v98 = vpack.c.bf16 %v97, %v96
    %v99 = vperm.slane %v24, 0
    %v104 = vunpack.c.l.b16 %v28
    %v105 = vunpack.c.l.b16 %v29
    %v106 = vunpack.c.l.b16 %v30
    %v107 = vunpack.c.l.b16 %v31
    %v108 = vpack.c.b16 %v105, %v104
    %v109 = vpack.c.b16 %v107, %v106
    %v113 = vsel %vm40, %v98, 0
    %115 = vmatpush.bf16.msra.mxu0 0
    %116 = vmatpush.bf16.msra.mxu0 0
    %117 = vmatpush.bf16.msra.mxu0 0
    %118 = vmatpush.bf16.msra.mxu0 0
    %119 = vmatpush.bf16.msra.mxu0 0
    %120 = vmatpush.bf16.msra.mxu0 0
    %121 = vmatpush.bf16.msra.mxu0 %v109
    %122 = vmatpush.bf16.msra.mxu0 %v108
    %123 = vmatmul.bf16.gmra.mxu0 %v113
    %v124 = vpop.f32.mrf.mxu0
    %v125 = vadd.f32 %v99, %v124
    %v126 = vpop.f32.mrf.mxu0
    %v127 = vadd.f32 %v99, %v126
    %128 = vdwg.mxu0
    %v129 = vpack.c.bf16 %v125, %v125
    %v130 = vpack.c.bf16 %v127, %v127
    %v133 = vunpack.c.l.b16 %v129
    %v134 = vunpack.c.l.b16 %v130
    %v135 = vpack.c.b16 %v134, %v133
    %136 = vrot.lane.b32.xlu0 %v135, 96
    %v137 = vpop.permute.xlu0 %136
    %vm138 = vcmask 64512
    %v140 = vsel %vm138, %v135, 0
    %v143 = vsel %vm138, %v137, 0
    %145 = vmatpush.bf16.xpose.msra.mxu0 0
    %146 = vmatpush.bf16.xpose.msra.mxu0 0
    %147 = vmatpush.bf16.xpose.msra.mxu0 0
    %148 = vmatpush.bf16.xpose.msra.mxu0 0
    %149 = vmatpush.bf16.xpose.msra.mxu0 0
    %150 = vmatpush.bf16.xpose.msra.mxu0 0
    %151 = vmatpush.bf16.xpose.msra.mxu0 0
    %152 = vmatpush.bf16.xpose.msra.mxu0 %v143
    %153 = vmatmul.bf16.gmra.mxu0 %v140
    %v154 = vpop.f32.mrf.mxu0
    %v155 = vadd.f32 %v26, %v154
    %v156 = vpop.f32.mrf.mxu0
    %v157 = vadd.f32 %v27, %v156
    %158 = vdwg.mxu0
    %vm159 = vcmask 130048
    %v160 = vsel %vm159, %v155, -inf
    %161 = vmax.xlane.f32.xlu0 %v160
    %v162 = vpop.xlane.xlu0 %161
    %v163 = vsel %vm159, %v157, -inf
    %164 = vmax.xlane.f32.xlu0 %v163
    %v165 = vpop.xlane.xlu0 %164
    %v166 = vsub.f32 %v155, %v162
    %v167 = vsub.f32 %v157, %v165
    %v168 = vmul.f32 %v166, 1.442695
    %v169 = vpow.pop %v168
    %v170 = vmul.f32 %v167, 1.442695
    %v171 = vpow.pop %v170
    %v172 = vsel %vm159, %v169, 0.0
    %173 = vadd.xlane.f32.xlu0 %v172
    %v174 = vpop.xlane.xlu0 %173
    %v175 = vsel %vm159, %v171, 0.0
    %176 = vadd.xlane.f32.xlu0 %v175
    %v177 = vpop.xlane.xlu0 %176
    %v178 = vrcp.pop %v174
    %v179 = vrcp.pop %v177
    %v180 = vmul.f32 %v169, %v178
    %v181 = vmul.f32 %v171, %v179
    %v182 = vpack.c.bf16 %v181, %v180
    %183 = vrot.lane.b32.xlu0 %v135, 64
    %v184 = vpop.permute.xlu0 %183
    %v187 = vsel %vm159, %v182, 0
    %189 = vmatpush.bf16.msra.mxu0 0
    %190 = vmatpush.bf16.msra.mxu0 0
    %191 = vmatpush.bf16.msra.mxu0 0
    %192 = vmatpush.bf16.msra.mxu0 0
    %193 = vmatpush.bf16.msra.mxu0 0
    %194 = vmatpush.bf16.msra.mxu0 0
    %195 = vmatpush.bf16.msra.mxu0 0
    %196 = vmatpush.bf16.msra.mxu0 %v184
    %197 = vmatmul.bf16.gmra.mxu0 %v187
    %v198 = vpop.f32.mrf.mxu0
    %v199 = vadd.f32 0.0, %v198
    %v200 = vpop.f32.mrf.mxu0
    %v201 = vadd.f32 0.0, %v200
    %202 = vdwg.mxu0
    %v203 = vpack.c.bf16 %v201, %v199
    %204 = vrot.lane.b32.xlu0 %v135, 120
    %v205 = vpop.permute.xlu0 %204
    %206 = vrot.lane.b32.xlu0 %v135, 88
    %v207 = vpop.permute.xlu0 %206
    %v209 = vsel %vm138, %v205, 0
    %v212 = vsel %vm138, %v207, 0
    %214 = vmatpush.bf16.xpose.msra.mxu0 0
    %215 = vmatpush.bf16.xpose.msra.mxu0 0
    %216 = vmatpush.bf16.xpose.msra.mxu0 0
    %217 = vmatpush.bf16.xpose.msra.mxu0 0
    %218 = vmatpush.bf16.xpose.msra.mxu0 0
    %219 = vmatpush.bf16.xpose.msra.mxu0 0
    %220 = vmatpush.bf16.xpose.msra.mxu0 0
    %221 = vmatpush.bf16.xpose.msra.mxu0 %v212
    %222 = vmatmul.bf16.gmra.mxu0 %v209
    %v223 = vpop.f32.mrf.mxu0
    %v224 = vadd.f32 %v26, %v223
    %v225 = vpop.f32.mrf.mxu0
    %v226 = vadd.f32 %v27, %v225
    %227 = vdwg.mxu0
    %v228 = vsel %vm159, %v224, -inf
    %229 = vmax.xlane.f32.xlu0 %v228
    %v230 = vpop.xlane.xlu0 %229
    %v231 = vsel %vm159, %v226, -inf
    %232 = vmax.xlane.f32.xlu0 %v231
    %v233 = vpop.xlane.xlu0 %232
    %v234 = vsub.f32 %v224, %v230
    %v235 = vsub.f32 %v226, %v233
    %v236 = vmul.f32 %v234, 1.442695
    %v237 = vpow.pop %v236
    %v238 = vmul.f32 %v235, 1.442695
    %v239 = vpow.pop %v238
    %v240 = vsel %vm159, %v237, 0.0
    %241 = vadd.xlane.f32.xlu0 %v240
    %v242 = vpop.xlane.xlu0 %241
    %v243 = vsel %vm159, %v239, 0.0
    %244 = vadd.xlane.f32.xlu0 %v243
    %v245 = vpop.xlane.xlu0 %244
    %v246 = vrcp.pop %v242
    %v247 = vrcp.pop %v245
    %v248 = vmul.f32 %v237, %v246
    %v249 = vmul.f32 %v239, %v247
    %v250 = vpack.c.bf16 %v249, %v248
    %251 = vrot.lane.b32.xlu0 %v135, 56
    %v252 = vpop.permute.xlu0 %251
    %v255 = vsel %vm159, %v250, 0
    %257 = vmatpush.bf16.msra.mxu0 0
    %258 = vmatpush.bf16.msra.mxu0 0
    %259 = vmatpush.bf16.msra.mxu0 0
    %260 = vmatpush.bf16.msra.mxu0 0
    %261 = vmatpush.bf16.msra.mxu0 0
    %262 = vmatpush.bf16.msra.mxu0 0
    %263 = vmatpush.bf16.msra.mxu0 0
    %264 = vmatpush.bf16.msra.mxu0 %v252
    %265 = vmatmul.bf16.gmra.mxu0 %v255
    %v266 = vpop.f32.mrf.mxu0
    %v267 = vadd.f32 0.0, %v266
    %v268 = vpop.f32.mrf.mxu0
    %v269 = vadd.f32 0.0, %v268
    %270 = vdwg.mxu0
    %v271 = vpack.c.bf16 %v269, %v267
    %v272 = vpack.c.b16 %v105, %v105
    %273 = vrot.lane.b32.xlu0 %v272, 32
    %v274 = vpop.permute.xlu0 %273
    %v276 = vsel %vm138, %v271, 0
    %vm278 = vcmask 1043456
    %v280 = vsel %vm278, %v274, 0
    %282 = vmatpush.bf16.msra.mxu0 0
    %283 = vmatpush.bf16.msra.mxu0 0
    %284 = vmatpush.bf16.msra.mxu0 0
    %285 = vmatpush.bf16.msra.mxu0 0
    %286 = vmatpush.bf16.msra.mxu0 0
    %287 = vmatpush.bf16.msra.mxu0 0
    %288 = vmatpush.bf16.msra.mxu0 0
    %289 = vmatpush.bf16.msra.mxu0 %v280
    %290 = vmatmul.bf16.gmra.mxu0 %v276
    %v291 = vpop.f32.mrf.mxu0
    %v292 = vadd.f32 0.0, %v291
    %v293 = vpop.f32.mrf.mxu0
    %v294 = vadd.f32 0.0, %v293
    %295 = vdwg.mxu0
    %v296 = vpack.c.b16 %v104, %v104
    %297 = vrot.lane.b32.xlu0 %v296, 32
    %v298 = vpop.permute.xlu0 %297
    %v300 = vsel %vm138, %v203, 0
    %v303 = vsel %vm278, %v298, 0
    %305 = vmatpush.bf16.msra.mxu0 0
    %306 = vmatpush.bf16.msra.mxu0 0
    %307 = vmatpush.bf16.msra.mxu0 0
    %308 = vmatpush.bf16.msra.mxu0 0
    %309 = vmatpush.bf16.msra.mxu0 0
    %310 = vmatpush.bf16.msra.mxu0 0
    %311 = vmatpush.bf16.msra.mxu0 0
    %312 = vmatpush.bf16.msra.mxu0 %v303
    %313 = vmatmul.bf16.gmra.mxu0 %v300
    %v314 = vpop.f32.mrf.mxu0
    %v315 = vadd.f32 %v292, %v314
    %v316 = vpop.f32.mrf.mxu0
    %v317 = vadd.f32 %v294, %v316
    %318 = vdwg.mxu0
    %319 = vrot.lane.b32.xlu0 %v135, 112
    %v320 = vpop.permute.xlu0 %319
    %321 = vrot.lane.b32.xlu0 %v135, 80
    %v322 = vpop.permute.xlu0 %321
    %v324 = vsel %vm138, %v320, 0
    %v327 = vsel %vm138, %v322, 0
    %329 = vmatpush.bf16.xpose.msra.mxu0 0
    %330 = vmatpush.bf16.xpose.msra.mxu0 0
    %331 = vmatpush.bf16.xpose.msra.mxu0 0
    %332 = vmatpush.bf16.xpose.msra.mxu0 0
    %333 = vmatpush.bf16.xpose.msra.mxu0 0
    %334 = vmatpush.bf16.xpose.msra.mxu0 0
    %335 = vmatpush.bf16.xpose.msra.mxu0 0
    %336 = vmatpush.bf16.xpose.msra.mxu0 %v327
    %337 = vmatmul.bf16.gmra.mxu0 %v324
    %v338 = vpop.f32.mrf.mxu0
    %v339 = vadd.f32 %v26, %v338
    %v340 = vpop.f32.mrf.mxu0
    %v341 = vadd.f32 %v27, %v340
    %342 = vdwg.mxu0
    %v343 = vsel %vm159, %v339, -inf
    %344 = vmax.xlane.f32.xlu0 %v343
    %v345 = vpop.xlane.xlu0 %344
    %v346 = vsel %vm159, %v341, -inf
    %347 = vmax.xlane.f32.xlu0 %v346
    %v348 = vpop.xlane.xlu0 %347
    %v349 = vsub.f32 %v339, %v345
    %v350 = vsub.f32 %v341, %v348
    %v351 = vmul.f32 %v349, 1.442695
    %v352 = vpow.pop %v351
    %v353 = vmul.f32 %v350, 1.442695
    %v354 = vpow.pop %v353
    %v355 = vsel %vm159, %v352, 0.0
    %356 = vadd.xlane.f32.xlu0 %v355
    %v357 = vpop.xlane.xlu0 %356
    %v358 = vsel %vm159, %v354, 0.0
    %359 = vadd.xlane.f32.xlu0 %v358
    %v360 = vpop.xlane.xlu0 %359
    %v361 = vrcp.pop %v357
    %v362 = vrcp.pop %v360
    %v363 = vmul.f32 %v352, %v361
    %v364 = vmul.f32 %v354, %v362
    %v365 = vpack.c.bf16 %v364, %v363
    %366 = vrot.lane.b32.xlu0 %v135, 48
    %v367 = vpop.permute.xlu0 %366
    %v370 = vsel %vm159, %v365, 0
    %372 = vmatpush.bf16.msra.mxu0 0
    %373 = vmatpush.bf16.msra.mxu0 0
    %374 = vmatpush.bf16.msra.mxu0 0
    %375 = vmatpush.bf16.msra.mxu0 0
    %376 = vmatpush.bf16.msra.mxu0 0
    %377 = vmatpush.bf16.msra.mxu0 0
    %378 = vmatpush.bf16.msra.mxu0 0
    %379 = vmatpush.bf16.msra.mxu0 %v367
    %380 = vmatmul.bf16.gmra.mxu0 %v370
    %v381 = vpop.f32.mrf.mxu0
    %v382 = vadd.f32 0.0, %v381
    %v383 = vpop.f32.mrf.mxu0
    %v384 = vadd.f32 0.0, %v383
    %385 = vdwg.mxu0
    %v386 = vpack.c.bf16 %v384, %v382
    %v387 = vpack.c.b16 %v106, %v106
    %388 = vrot.lane.b32.xlu0 %v387, 32
    %v389 = vpop.permute.xlu0 %388
    %v391 = vsel %vm138, %v386, 0
    %v394 = vsel %vm278, %v389, 0
    %396 = vmatpush.bf16.msra.mxu0 0
    %397 = vmatpush.bf16.msra.mxu0 0
    %398 = vmatpush.bf16.msra.mxu0 0
    %399 = vmatpush.bf16.msra.mxu0 0
    %400 = vmatpush.bf16.msra.mxu0 0
    %401 = vmatpush.bf16.msra.mxu0 0
    %402 = vmatpush.bf16.msra.mxu0 0
    %403 = vmatpush.bf16.msra.mxu0 %v394
    %404 = vmatmul.bf16.gmra.mxu0 %v391
    %v405 = vpop.f32.mrf.mxu0
    %v406 = vadd.f32 0.0, %v405
    %v407 = vpop.f32.mrf.mxu0
    %v408 = vadd.f32 0.0, %v407
    %409 = vdwg.mxu0
    %v410 = vadd.f32 %v315, %v406
    %v411 = vadd.f32 %v317, %v408
    %412 = vrot.lane.b32.xlu0 %v135, 104
    %v413 = vpop.permute.xlu0 %412
    %414 = vrot.lane.b32.xlu0 %v135, 72
    %v415 = vpop.permute.xlu0 %414
    %v417 = vsel %vm138, %v413, 0
    %v420 = vsel %vm138, %v415, 0
    %422 = vmatpush.bf16.xpose.msra.mxu0 0
    %423 = vmatpush.bf16.xpose.msra.mxu0 0
    %424 = vmatpush.bf16.xpose.msra.mxu0 0
    %425 = vmatpush.bf16.xpose.msra.mxu0 0
    %426 = vmatpush.bf16.xpose.msra.mxu0 0
    %427 = vmatpush.bf16.xpose.msra.mxu0 0
    %428 = vmatpush.bf16.xpose.msra.mxu0 0
    %429 = vmatpush.bf16.xpose.msra.mxu0 %v420
    %430 = vmatmul.bf16.gmra.mxu0 %v417
    %v431 = vpop.f32.mrf.mxu0
    %v432 = vadd.f32 %v26, %v431
    %v433 = vpop.f32.mrf.mxu0
    %v434 = vadd.f32 %v27, %v433
    %435 = vdwg.mxu0
    %v436 = vsel %vm159, %v432, -inf
    %437 = vmax.xlane.f32.xlu0 %v436
    %v438 = vpop.xlane.xlu0 %437
    %v439 = vsel %vm159, %v434, -inf
    %440 = vmax.xlane.f32.xlu0 %v439
    %v441 = vpop.xlane.xlu0 %440
    %v442 = vsub.f32 %v432, %v438
    %v443 = vsub.f32 %v434, %v441
    %v444 = vmul.f32 %v442, 1.442695
    %v445 = vpow.pop %v444
    %v446 = vmul.f32 %v443, 1.442695
    %v447 = vpow.pop %v446
    %v448 = vsel %vm159, %v445, 0.0
    %449 = vadd.xlane.f32.xlu0 %v448
    %v450 = vpop.xlane.xlu0 %449
    %v451 = vsel %vm159, %v447, 0.0
    %452 = vadd.xlane.f32.xlu0 %v451
    %v453 = vpop.xlane.xlu0 %452
    %v454 = vrcp.pop %v450
    %v455 = vrcp.pop %v453
    %v456 = vmul.f32 %v445, %v454
    %v457 = vmul.f32 %v447, %v455
    %v458 = vpack.c.bf16 %v457, %v456
    %459 = vrot.lane.b32.xlu0 %v135, 40
    %v460 = vpop.permute.xlu0 %459
    %v463 = vsel %vm159, %v458, 0
    %465 = vmatpush.bf16.msra.mxu0 0
    %466 = vmatpush.bf16.msra.mxu0 0
    %467 = vmatpush.bf16.msra.mxu0 0
    %468 = vmatpush.bf16.msra.mxu0 0
    %469 = vmatpush.bf16.msra.mxu0 0
    %470 = vmatpush.bf16.msra.mxu0 0
    %471 = vmatpush.bf16.msra.mxu0 0
    %472 = vmatpush.bf16.msra.mxu0 %v460
    %473 = vmatmul.bf16.gmra.mxu0 %v463
    %v474 = vpop.f32.mrf.mxu0
    %v475 = vadd.f32 0.0, %v474
    %v476 = vpop.f32.mrf.mxu0
    %v477 = vadd.f32 0.0, %v476
    %478 = vdwg.mxu0
    %v479 = vpack.c.bf16 %v477, %v475
    %v480 = vpack.c.b16 %v107, %v107
    %481 = vrot.lane.b32.xlu0 %v480, 32
    %v482 = vpop.permute.xlu0 %481
    %v484 = vsel %vm138, %v479, 0
    %v487 = vsel %vm278, %v482, 0
    %489 = vmatpush.bf16.msra.mxu0 0
    %490 = vmatpush.bf16.msra.mxu0 0
    %491 = vmatpush.bf16.msra.mxu0 0
    %492 = vmatpush.bf16.msra.mxu0 0
    %493 = vmatpush.bf16.msra.mxu0 0
    %494 = vmatpush.bf16.msra.mxu0 0
    %495 = vmatpush.bf16.msra.mxu0 0
    %496 = vmatpush.bf16.msra.mxu0 %v487
    %497 = vmatmul.bf16.gmra.mxu0 %v484
    %v498 = vpop.f32.mrf.mxu0
    %v499 = vadd.f32 0.0, %v498
    %v500 = vpop.f32.mrf.mxu0
    %v501 = vadd.f32 0.0, %v500
    %502 = vdwg.mxu0
    %v503 = vadd.f32 %v410, %v499
    %v504 = vadd.f32 %v411, %v501
    %v505 = vadd.f32 %v16, %v503
    %v506 = vadd.f32 %v17, %v504
    %v507 = vperm.slane %v22, 0
    %v508 = vadd.f32 %v505, %v507
    %v509 = vadd.f32 %v506, %v507
    %v510 = vsel %vm40, %v508, 0.0
    %511 = vadd.xlane.f32.xlu0 %v510
    %v512 = vpop.xlane.xlu0 %511
    %v513 = vsel %vm40, %v509, 0.0
    %514 = vadd.xlane.f32.xlu0 %v513
    %v515 = vpop.xlane.xlu0 %514
    %v516 = vmul.f32 %v512, %v53
    %v517 = vmul.f32 %v515, %v53
    %v518 = vsub.f32 %v508, %v516
    %v519 = vsub.f32 %v509, %v517
    %v520 = vmul.f32 %v518, %v518
    %v521 = vmul.f32 %v519, %v519
    %v522 = vsel %vm40, %v520, 0.0
    %523 = vadd.xlane.f32.xlu0 %v522
    %v524 = vpop.xlane.xlu0 %523
    %v525 = vsel %vm40, %v521, 0.0
    %526 = vadd.xlane.f32.xlu0 %v525
    %v527 = vpop.xlane.xlu0 %526
    %v528 = vmul.f32 %v524, %v53
    %v529 = vmul.f32 %v527, %v53
    %v530 = vadd.f32 %v528, 1e-05
    %v531 = vadd.f32 %v529, 1e-05
    %v532 = vrsqrt.pop %v530
    %v533 = vmul.f32 %v532, %v530
    %v534 = vmul.f32 %v533, %v532
    %v535 = vmul.f32 0.5, %v534
    %v536 = vsub.f32 1.5, %v535
    %v537 = vmul.f32 %v532, %v536
    %vm538 = vweird.f32 %v530
    %vm539 = vweird.f32 %v532
    %vm540 = vmor %vm538, %vm539
    %v541 = vsel %vm540, %v532, %v537
    %v542 = vrsqrt.pop %v531
    %v543 = vmul.f32 %v542, %v531
    %v544 = vmul.f32 %v543, %v542
    %v545 = vmul.f32 0.5, %v544
    %v546 = vsub.f32 1.5, %v545
    %v547 = vmul.f32 %v542, %v546
    %vm548 = vweird.f32 %v531
    %vm549 = vweird.f32 %v542
    %vm550 = vmor %vm548, %vm549
    %v551 = vsel %vm550, %v542, %v547
    %v552 = vmul.f32 %v518, %v541
    %v553 = vmul.f32 %v519, %v551
    %v554 = vperm.slane %v20, 0
    %v555 = vmul.f32 %v552, %v554
    %v556 = vmul.f32 %v553, %v554
    %v557 = vperm.slane %v21, 0
    %v558 = vadd.f32 %v555, %v557
    %v559 = vadd.f32 %v556, %v557
    %v560 = vpack.c.bf16 %v559, %v558
    %v561 = vperm.slane %v25, 0
    %v566 = vunpack.c.l.b16 %v32
    %v567 = vunpack.c.l.b16 %v33
    %v568 = vunpack.c.l.b16 %v34
    %v569 = vunpack.c.l.b16 %v35
    %v570 = vpack.c.b16 %v567, %v566
    %v571 = vpack.c.b16 %v569, %v568
    %v575 = vsel %vm40, %v560, 0
    %577 = vmatpush.bf16.msra.mxu0 0
    %578 = vmatpush.bf16.msra.mxu0 0
    %579 = vmatpush.bf16.msra.mxu0 0
    %580 = vmatpush.bf16.msra.mxu0 0
    %581 = vmatpush.bf16.msra.mxu0 0
    %582 = vmatpush.bf16.msra.mxu0 0
    %583 = vmatpush.bf16.msra.mxu0 %v571
    %584 = vmatpush.bf16.msra.mxu0 %v570
    %585 = vmatmul.bf16.gmra.mxu0 %v575
    %v586 = vpop.f32.mrf.mxu0
    %v587 = vadd.f32 %v561, %v586
    %v588 = vpop.f32.mrf.mxu0
    %v589 = vadd.f32 %v561, %v588
    %590 = vdwg.mxu0
    %v591 = vmul.f32 %v587, 0.5
    %v592 = vmul.f32 %v589, 0.5
    %v593 = vmul.f32 %v587, 0.70710677
    %v594 = vmul.f32 %v589, 0.70710677
    %v595 = vmul.f32 %v593, %v593
    %v596 = vmin.f32 16.0, %v595
    %v597 = vmul.f32 %v596, 2.1237322e-06
    %v598 = vadd.f32 %v597, 0.00028619796
    %v599 = vmul.f32 %v596, %v598
    %v600 = vadd.f32 %v599, 0.0036580483
    %v601 = vmul.f32 %v596, %v600
    %v602 = vadd.f32 %v601, 0.05243302
    %v603 = vmul.f32 %v596, %v602
    %v604 = vadd.f32 %v603, 0.18741608
    %v605 = vmul.f32 %v596, %v604
    %v606 = vadd.f32 %v605, 1.1283791
    %v607 = vmul.f32 %v593, %v606
    %v608 = vmul.f32 %v596, 3.8918573e-05
    %v609 = vadd.f32 %v608, 0.001143296
    %v610 = vmul.f32 %v596, %v609
    %v611 = vadd.f32 %v610, 0.014752088
    %v612 = vmul.f32 %v596, %v611
    %v613 = vadd.f32 %v612, 0.112945676
    %v614 = vmul.f32 %v596, %v613
    %v615 = vadd.f32 %v614, 0.4994258
    %v616 = vmul.f32 %v596, %v615
    %v617 = vadd.f32 %v616, 1.0
    %v618 = vrcp.pop %v617
    %v619 = vmul.f32 %v617, %v618
    %v620 = vsub.f32 1.0, %v619
    %v621 = vmul.f32 %v618, %v620
    %v622 = vadd.f32 %v618, %v621
    %vm623 = vweird.f32 %v617
    %vm624 = vweird.f32 %v618
    %vm625 = vmor %vm623, %vm624
    %v626 = vsel %vm625, %v618, %v622
    %v627 = vand.u32 2147483647, %v617
    %vm628 = vcmp.eq.f32.partialorder %v627, 8.507059e+37
    %v629 = vand.u32 %v617, 2147483648
    %v630 = vor.u32 1.1754944e-38, %v629
    %v631 = vsel %vm628, %v630, %v626
    %v632 = vmul.f32 %v607, %v631
    %v633 = vmin.f32 %v632, 1.0
    %v634 = vmax.f32 %v633, -1.0
    %v635 = vmul.f32 %v594, %v594
    %v636 = vmin.f32 16.0, %v635
    %v637 = vmul.f32 %v636, 2.1237322e-06
    %v638 = vadd.f32 %v637, 0.00028619796
    %v639 = vmul.f32 %v636, %v638
    %v640 = vadd.f32 %v639, 0.0036580483
    %v641 = vmul.f32 %v636, %v640
    %v642 = vadd.f32 %v641, 0.05243302
    %v643 = vmul.f32 %v636, %v642
    %v644 = vadd.f32 %v643, 0.18741608
    %v645 = vmul.f32 %v636, %v644
    %v646 = vadd.f32 %v645, 1.1283791
    %v647 = vmul.f32 %v594, %v646
    %v648 = vmul.f32 %v636, 3.8918573e-05
    %v649 = vadd.f32 %v648, 0.001143296
    %v650 = vmul.f32 %v636, %v649
    %v651 = vadd.f32 %v650, 0.014752088
    %v652 = vmul.f32 %v636, %v651
    %v653 = vadd.f32 %v652, 0.112945676
    %v654 = vmul.f32 %v636, %v653
    %v655 = vadd.f32 %v654, 0.4994258
    %v656 = vmul.f32 %v636, %v655
    %v657 = vadd.f32 %v656, 1.0
    %v658 = vrcp.pop %v657
    %v659 = vmul.f32 %v657, %v658
    %v660 = vsub.f32 1.0, %v659
    %v661 = vmul.f32 %v658, %v660
    %v662 = vadd.f32 %v658, %v661
    %vm663 = vweird.f32 %v657
    %vm664 = vweird.f32 %v658
    %vm665 = vmor %vm663, %vm664
    %v666 = vsel %vm665, %v658, %v662
    %v667 = vand.u32 2147483647, %v657
    %vm668 = vcmp.eq.f32.partialorder %v667, 8.507059e+37
    %v669 = vand.u32 %v657, 2147483648
    %v670 = vor.u32 1.1754944e-38, %v669
    %v671 = vsel %vm668, %v670, %v666
    %v672 = vmul.f32 %v647, %v671
    %v673 = vmin.f32 %v672, 1.0
    %v674 = vmax.f32 %v673, -1.0
    %v675 = vadd.f32 %v634, 1.0
    %v676 = vadd.f32 %v674, 1.0
    %v677 = vmul.f32 %v591, %v675
    %v678 = vmul.f32 %v592, %v676
    %v679 = vpack.c.bf16 %v678, %v677
    %v680 = vperm.slane %v23, 0
    %v685 = vunpack.c.l.b16 %v36
    %v686 = vunpack.c.l.b16 %v37
    %v687 = vunpack.c.l.b16 %v38
    %v688 = vunpack.c.l.b16 %v39
    %v689 = vpack.c.b16 %v686, %v685
    %v690 = vpack.c.b16 %v688, %v687
    %693 = vmatpush.bf16.xpose.msra.mxu0 0
    %694 = vmatpush.bf16.xpose.msra.mxu0 0
    %695 = vmatpush.bf16.xpose.msra.mxu0 0
    %696 = vmatpush.bf16.xpose.msra.mxu0 0
    %697 = vmatpush.bf16.xpose.msra.mxu0 0
    %698 = vmatpush.bf16.xpose.msra.mxu0 0
    %699 = vmatpush.bf16.xpose.msra.mxu0 %v690
    %700 = vmatpush.bf16.xpose.msra.mxu0 %v689
    %701 = vmatmul.bf16.gmra.mxu0 %v679
    %v702 = vpop.f32.mrf.mxu0
    %v703 = vadd.f32 %v680, %v702
    %v704 = vpop.f32.mrf.mxu0
    %v705 = vadd.f32 %v680, %v704
    %706 = vdwg.mxu0
    %v707 = vadd.f32 %v508, %v703
    %v708 = vadd.f32 %v509, %v705
    %709 = vst.msk [vmem:[#allocation2] sm:$0xff] %vm40, %v707
    %710 = vst.msk [vmem:[#allocation2 + $0x8] sm:$0xff] %vm40, %v708
    // Predicated region
    $region14: #{gpt_block.1} parent=1 // pred_check
      _
    $region15: #{gpt_block.1} parent=1 // pred_check_branch
      %712 = sbr.rel (0) target = $region17
    $region16: #{gpt_block.1} parent=1 // pred_region
      %714 = vsyncadd [#allocation3], 0
      %s715 = sshll.u32 [#allocation2], 4
      %s716 = int_to_ptr.vmem [resolvable:$true] %s715
      %s717 = sshll.u32 %s3, 4
      %s718 = int_to_ptr.hbm [resolvable:$true] %s717
      %723 = dma.vmem_to_hbm [thread:$0]  %s716, 256, %s718, [#allocation3], 128, 128, 8
    $region17: #{gpt_block.1} parent=1 // pred_fallthru
      _
    // Predicated region
    $region18: #{gpt_block.1} parent=1 // pred_check
      _
    $region19: #{gpt_block.1} parent=1 // pred_check_branch
      %725 = sbr.rel (0) target = $region21
    $region20: #{gpt_block.1} parent=1 // pred_region
      %727 = dma.done [#allocation3], 256
    $region21: #{gpt_block.1} parent=1 // pred_fallthru
      _
    %728 = vsyncpa [#allocation3], 1

</llo_original>
